<compile_context>
chip_gen: v6e
topology: v6e:2x2x1
jax: 0.10.0
libtpu: 0.0.40
codegen_flags: <defaults>
</compile_context>

<pallas_src>
import functools

import jax
import jax.numpy as jnp
from jax.experimental import pallas as pl
from jax.experimental.pallas import tpu as pltpu

_LANE = 128
_ROW_ALIGN = 32                 # sublane-packing-safe for f32/bf16/i8/fp8
_SINGLE_BLOCK_BYTES = 1 << 20   # <= 1 MiB: one block, per-step overhead moot
_MIN_STEPS = 4                  # mid-size tensors: pipeline DMAs + feed 2 TCs


def _lrelu_bias_kernel(bias_ref, x_ref, o_ref, *, alpha):
    # Compute in f32, add the f32 SMEM bias, cast once (HBM-bound: free).
    x = x_ref[...].astype(jnp.float32)
    y = jnp.where(x >= 0, x, alpha * x) + bias_ref[0]
    o_ref[...] = y.astype(o_ref.dtype)


def _lrelu_kernel(x_ref, o_ref, *, alpha):
    x = x_ref[...]
    o_ref[...] = jnp.where(x >= 0, x, alpha * x).astype(o_ref.dtype)


def _round_up(a, b):
    return ((a + b - 1) // b) * b


def _vmem_capacity_bytes():
    """Per-core VMEM capacity; conservative (v7x) fallback if unavailable."""
    try:
        info = pltpu.get_tpu_info()
        cap = getattr(info, "vmem_capacity_bytes", None)
        if cap:
            return int(cap)
    except Exception:
        pass
    return 64 << 20


def _lrelu_jnp(x, alpha, bias_scalar, out_dtype):
    xf = x.astype(jnp.float32)
    y = jnp.where(xf >= 0, xf, alpha * xf)
    if bias_scalar is not None:
        y = y + bias_scalar
    return y.astype(out_dtype)


def leaky_relu_shifted(x, bias_param=None, *, alpha=0.01):
    """Pallas TPU implementation of LeakyReLU_shifted.forward.

    x: any-shape float array (NCHW in the reference usage).
    bias_param: scalar (shape (1,)) bias added after the activation, or None.
    """
    orig_shape = x.shape
    in_dtype = x.dtype
    n = x.size

    has_bias = bias_param is not None
    if has_bias:
        bias_arr = jnp.asarray(bias_param, dtype=jnp.float32).reshape(1)
        # Match PyTorch promotion: bf16 activation + f32 parameter -> f32.
        out_dtype = jnp.promote_types(in_dtype, jnp.float32)
    else:
        bias_arr = None
        out_dtype = in_dtype

    if n == 0:
        return jnp.zeros(orig_shape, out_dtype)

    flat = x.reshape(-1)                      # free for contiguous inputs
    n_main = (n // _LANE) * _LANE             # 128-aligned prefix (zero-copy)
    tail = flat[n_main:]                      # < 128 ragged elements

    bias_scalar = bias_arr[0] if has_bias else None

    if n_main == 0:
        # Entire tensor is smaller than one lane row: plain-jnp path.
        return _lrelu_jnp(tail, alpha, bias_scalar, out_dtype).reshape(orig_shape)

    rows = n_main // _LANE
    slab = flat[:n_main].reshape(rows, _LANE)

    in_item = jnp.dtype(in_dtype).itemsize
    out_item = jnp.dtype(out_dtype).itemsize
    max_item = max(in_item, out_item)

    # Generation-aware block sizing.
    vmem_cap = _vmem_capacity_bytes()
    if vmem_cap >= (96 << 20):                # v5e / v6e: 128 MiB VMEM
        target_block_bytes, vmem_cap_limit = 16 << 20, 96 << 20
    else:                                     # v7x: 64 MiB VMEM
        target_block_bytes, vmem_cap_limit = 8 << 20, 48 << 20

    total_bytes = rows * _LANE * max_item
    if total_bytes <= _SINGLE_BLOCK_BYTES:
        row_tile = rows                       # full-array block (legal shape)
        grid = (1,)
    else:
        target_rows = max(
            _ROW_ALIGN,
            (target_block_bytes // (_LANE * max_item)) // _ROW_ALIGN * _ROW_ALIGN,
        )
        # Guarantee >= _MIN_STEPS grid steps for DMA pipelining / v7x sharding.
        min_step_rows = _round_up(pl.cdiv(rows, _MIN_STEPS), _ROW_ALIGN)
        row_tile = min(target_rows, min_step_rows)
        grid = (pl.cdiv(rows, row_tile),)     # partial last block is fine

    in_block = row_tile * _LANE * in_item
    out_block = row_tile * _LANE * out_item
    # in + out each double-buffered (+ headroom), capped per generation.
    vmem_limit = int(min(max(3 * (in_block + out_block), 32 << 20), vmem_cap_limit))

    x_spec = pl.BlockSpec((row_tile, _LANE), lambda i: (i, 0))
    out_spec = pl.BlockSpec((row_tile, _LANE), lambda i: (i, 0))
    out_shape = jax.ShapeDtypeStruct((rows, _LANE), out_dtype)
    cparams = pltpu.CompilerParams(
        dimension_semantics=("parallel",),
        vmem_limit_bytes=vmem_limit,
    )

    if has_bias:
        main_out = pl.pallas_call(
            functools.partial(_lrelu_bias_kernel, alpha=alpha),
            out_shape=out_shape,
            grid_spec=pltpu.PrefetchScalarGridSpec(
                num_scalar_prefetch=0,
                grid=grid,
                in_specs=[
                    pl.BlockSpec(memory_space=pltpu.MemorySpace.SMEM),
                    x_spec,
                ],
                out_specs=out_spec,
            ),
            compiler_params=cparams,
        )(bias_arr, slab)
    else:
        main_out = pl.pallas_call(
            functools.partial(_lrelu_kernel, alpha=alpha),
            out_shape=out_shape,
            grid_spec=pltpu.PrefetchScalarGridSpec(
                num_scalar_prefetch=0,
                grid=grid,
                in_specs=[x_spec],
                out_specs=out_spec,
            ),
            compiler_params=cparams,
        )(slab)

    main_flat = main_out.reshape(-1)
    if n_main == n:
        return main_flat.reshape(orig_shape)

    # Ragged tail (<128 elems): tiny jnp compute + single concat (no pad pass).
    tail_out = _lrelu_jnp(tail, alpha, bias_scalar, out_dtype)
    return jnp.concatenate([main_flat, tail_out]).reshape(orig_shape)


class LeakyReLUShiftedPallas:
    """Mirror of the PyTorch module (deterministic init: bias_param = zeros(1))."""

    def __init__(self, alpha=0.01, bias=True):
        self.alpha = alpha
        self.bias = bias
        if self.bias:
            self.bias_param = jnp.zeros((1,), dtype=jnp.float32)
        else:
            self.bias_param = None

    def __call__(self, x):
        return leaky_relu_shifted(x, self.bias_param, alpha=self.alpha)


if __name__ == "__main__":
    key = jax.random.PRNGKey(0)

    # NCHW input, small shape (lane-aligned => zero-copy kernel path).
    x = jax.random.normal(key, (2, 4, 16, 16), dtype=jnp.float32)

    mod = LeakyReLUShiftedPallas(alpha=0.01, bias=True)
    mod.bias_param = jnp.array([0.5], dtype=jnp.float32)   # exercise the add path

    out = mod(x)
    jax.block_until_ready(out)
    ref = jnp.where(x >= 0, x, 0.01 * x) + 0.5
    assert out.shape == x.shape
    assert jnp.allclose(out, ref, atol=1e-6), "mismatch vs reference (bias=True)"

    # bias=False variant.
    mod_nb = LeakyReLUShiftedPallas(alpha=0.2, bias=False)
    out_nb = mod_nb(x)
    jax.block_until_ready(out_nb)
    ref_nb = jnp.where(x >= 0, x, 0.2 * x)
    assert jnp.allclose(out_nb, ref_nb, atol=1e-6), "mismatch vs reference (bias=False)"

    # Ragged (<128-element) shape: pure jnp tail path.
    x2 = jax.random.normal(jax.random.PRNGKey(1), (3, 5, 7), dtype=jnp.float32)
    out2 = leaky_relu_shifted(x2, jnp.array([0.25], dtype=jnp.float32), alpha=0.01)
    jax.block_until_ready(out2)
    ref2 = jnp.where(x2 >= 0, x2, 0.01 * x2) + 0.25
    assert jnp.allclose(out2, ref2, atol=1e-6), "mismatch vs reference (ragged small)"

    # Ragged-with-prefix shape: kernel on the 128-aligned prefix + jnp tail + concat.
    x3 = jax.random.normal(jax.random.PRNGKey(2), (2, 3, 50), dtype=jnp.float32)
    out3 = leaky_relu_shifted(x3, jnp.array([-0.1], dtype=jnp.float32), alpha=0.05)
    jax.block_until_ready(out3)
    ref3 = jnp.where(x3 >= 0, x3, 0.05 * x3) - 0.1
    assert jnp.allclose(out3, ref3, atol=1e-6), "mismatch vs reference (ragged prefix)"

    # Mid-size tensor (>1 MiB) exercises the multi-step parallel grid path.
    x4 = jax.random.normal(jax.random.PRNGKey(3), (8, 64, 32, 32), dtype=jnp.float32)
    out4 = leaky_relu_shifted(x4, jnp.array([0.3], dtype=jnp.float32), alpha=0.01)
    jax.block_until_ready(out4)
    ref4 = jnp.where(x4 >= 0, x4, 0.01 * x4) + 0.3
    assert jnp.allclose(out4, ref4, atol=1e-6), "mismatch vs reference (multi-step)"

    print("KERNEL_OK")
</pallas_src>

<mosaic_0001>
module attributes {stable_mosaic.version = 11 : i64} {
  func.func @_lrelu_bias_kernel(%arg0: i32, %arg1: memref<1xf32, #tpu.memory_space<smem>>, %arg2: memref<16x128xf32, #tpu.memory_space<vmem>>, %arg3: memref<16x128xf32, #tpu.memory_space<vmem>>) attributes {dimension_semantics = [#tpu.dimension_semantics<parallel>], iteration_bounds = array<i64: 1>, scalar_prefetch = 0 : i64, scratch_operands = 0 : i64, tpu.core_type = #tpu.core_type<tc>, window_params = [{transform_indices = @transform_0, window_bounds = array<i64: 1>}, {transform_indices = @transform_1, window_bounds = array<i64: 16, 128>}, {transform_indices = @transform_2, window_bounds = array<i64: 16, 128>}]} {
    %c0 = arith.constant 0 : index
    %c0_0 = arith.constant 0 : index
    %0 = vector.load %arg2[%c0, %c0_0] : memref<16x128xf32, #tpu.memory_space<vmem>>, vector<16x128xf32>
    %cst = arith.constant 0.000000e+00 : f32
    %1 = vector.broadcast %cst : f32 to vector<16x128xf32>
    %2 = arith.cmpf oge, %0, %1 : vector<16x128xf32>
    %cst_1 = arith.constant 0.00999999977 : f32
    %3 = vector.broadcast %cst_1 : f32 to vector<16x128xf32>
    %4 = arith.mulf %3, %0 : vector<16x128xf32>
    %5 = arith.select %2, %0, %4 : vector<16x128xi1>, vector<16x128xf32>
    %c0_2 = arith.constant 0 : index
    %6 = memref.load %arg1[%c0_2] : memref<1xf32, #tpu.memory_space<smem>>
    %7 = vector.broadcast %6 : f32 to vector<16x128xf32>
    %8 = arith.addf %5, %7 : vector<16x128xf32>
    %c0_3 = arith.constant 0 : index
    %c0_4 = arith.constant 0 : index
    %9 = vector.load %arg3[%c0_3, %c0_4] : memref<16x128xf32, #tpu.memory_space<vmem>>, vector<16x128xf32>
    tpu.vector_store %arg3[%c0_3, %c0_4], %8 {strides = array<i32>} : memref<16x128xf32, #tpu.memory_space<vmem>>, vector<16x128xf32>,
    return
  }
  func.func @transform_0(%arg0: i32) -> i32 {
    %c0_i32 = arith.constant 0 : i32
    %c0_i32_0 = arith.constant 0 : i32
    return %c0_i32 : i32
  }
  func.func @transform_1(%arg0: i32) -> (i32, i32) {
    %c0_i32 = arith.constant 0 : i32
    %c0_i32_0 = arith.constant 0 : i32
    return %arg0, %c0_i32 : i32, i32
  }
  func.func @transform_2(%arg0: i32) -> (i32, i32) {
    %c0_i32 = arith.constant 0 : i32
    %c0_i32_0 = arith.constant 0 : i32
    return %arg0, %c0_i32 : i32, i32
  }
}

</mosaic_0001>

<llo_original>
// kernel: tpu_custom_call.1
$region0: #{tpu_custom_call.1}
  #allocation0 [shape = 'u32[]', space=smem, size = 0x4, offset = 0x4, fixed_abs, tag = 'smem constant byte address 0x4 - core index']
  #allocation1 [shape = 'u32[144,128]{1,0:T(1,128)}', space=vmem, size = 0x12000, scoped, tag = 'internal scratch']
  #allocation2 [shape = 'f32[1]{0:T(128)S(6)}', space=smem, size = 0x200, scoped, tag = 'scoped memory for tpu_custom_call.1']
  %s0 = inlined_call_operand.<no memory space> [shape: f32[1], index: 0, kind: input, shape index: {}]
  %s1 = inlined_call_operand.hbm [shape: f32[16,128], index: 1, kind: input, shape index: {}]
  %s2 = inlined_call_operand.hbm [shape: f32[16,128], index: 2, kind: output, shape index: {}]
  %s3 = sld [smem:[#allocation0]]
  $region22: #{tpu_custom_call.1} parent=0
    _
  %s5 = ssub.s32 1, %s3
  %s6 = scalar_select 0, %s5, %s3
  %7 = sst [smem:[#allocation2]] %s0
  $region1: #{tpu_custom_call.1} parent=0
    #allocation3 [shape = 'u8[8192]{0}', space=vmem, size = 0x2000, scoped, tag = 'input window, operand 1, single buffered']
    #allocation4 [shape = 's32[1]{0}', space=sflag, size = 0x4, scoped, tag = 'scoped memory for tpu_custom_call.1']
    #allocation5 [shape = 's32[1]{0}', space=sflag, size = 0x4, scoped, tag = 'scoped memory for tpu_custom_call.1']
    #allocation6 [shape = 'u8[8192]{0}', space=vmem, size = 0x2000, scoped, tag = 'output window, operand 0, single buffered']
    %8 = vsyncpa [#allocation4], 0
    %9 = vsyncpa [#allocation5], 0
    // Predicated region
    $region2: #{tpu_custom_call.1} parent=1 // pred_check
      _
    $region3: #{tpu_custom_call.1} parent=1 // pred_check_branch
      %11 = sbr.rel (0) target = $region5
    $region4: #{tpu_custom_call.1} parent=1 // pred_region
      _
    $region5: #{tpu_custom_call.1} parent=1 // pred_fallthru
      _
    // Predicated region
    $region6: #{tpu_custom_call.1} parent=1 // pred_check
      _
    $region7: #{tpu_custom_call.1} parent=1 // pred_check_branch
      %13 = sbr.rel (0) target = $region9
    $region8: #{tpu_custom_call.1} parent=1 // pred_region
      %s15 = ssub.s32 256, 256
      %16 = vsyncadd [#allocation4], %s15
      %s17 = sshll.u32 [#allocation3], 4
      %s18 = int_to_ptr.vmem [resolvable:$true] %s17
      %23 = dma.hbm_to_vmem [thread:$0]  %s1, 256, %s18, [#allocation4], 128, 128, 8
    $region9: #{tpu_custom_call.1} parent=1 // pred_fallthru
      _
    // Predicated region
    $region10: #{tpu_custom_call.1} parent=1 // pred_check
      _
    $region11: #{tpu_custom_call.1} parent=1 // pred_check_branch
      %25 = sbr.rel (0) target = $region13
    $region12: #{tpu_custom_call.1} parent=1 // pred_region
      %26 = dma.done [#allocation4], 256
    $region13: #{tpu_custom_call.1} parent=1 // pred_fallthru
      _
    %v27 = vld [vmem:[#allocation3] sm:$0xff]
    %v28 = vld [vmem:[#allocation3 + $0x8] sm:$0xff]
    %vm29 = vcmp.ge.f32.partialorder %v27, 0.0
    %vm30 = vcmp.ge.f32.partialorder %v28, 0.0
    %v31 = vmul.f32 %v27, 0.01
    %v32 = vmul.f32 %v28, 0.01
    %v33 = vsel %vm29, %v27, %v31
    %v34 = vsel %vm30, %v28, %v32
    %s35 = sld [smem:[#allocation2]]
    %v36 = vstv %s35
    %v37 = vadd.f32 %v33, %v36
    %v38 = vadd.f32 %v34, %v36
    %39 = vst [vmem:[#allocation6] sm:$0xff] %v37
    %40 = vst [vmem:[#allocation6 + $0x8] sm:$0xff] %v38
    // Predicated region
    $region14: #{tpu_custom_call.1} parent=1 // pred_check
      _
    $region15: #{tpu_custom_call.1} parent=1 // pred_check_branch
      %42 = sbr.rel (0) target = $region17
    $region16: #{tpu_custom_call.1} parent=1 // pred_region
      %s44 = ssub.s32 256, 256
      %45 = vsyncadd [#allocation5], %s44
      %s46 = sshll.u32 [#allocation6], 4
      %s47 = int_to_ptr.vmem [resolvable:$true] %s46
      %52 = dma.vmem_to_hbm [thread:$0]  %s47, 256, %s2, [#allocation5], 128, 128, 8
    $region17: #{tpu_custom_call.1} parent=1 // pred_fallthru
      _
    // Predicated region
    $region18: #{tpu_custom_call.1} parent=1 // pred_check
      _
    $region19: #{tpu_custom_call.1} parent=1 // pred_check_branch
      %54 = sbr.rel (0) target = $region21
    $region20: #{tpu_custom_call.1} parent=1 // pred_region
      %55 = dma.done [#allocation5], 256
    $region21: #{tpu_custom_call.1} parent=1 // pred_fallthru
      _
    %56 = vsyncpa [#allocation4], 1
    %57 = vsyncpa [#allocation5], 1

</llo_original>
